<compile_context>
chip_gen: v6e
topology: v6e:2x2x1
jax: 0.10.0
libtpu: 0.0.40
codegen_flags: <defaults>
</compile_context>

<pallas_src>
import jax
import jax.numpy as jnp
from jax.experimental import pallas as pl
from jax.experimental.pallas import tpu as pltpu


def _head_kernel(x_ref, w_ref, b_ref, out_ref):
    # One MXU matmul with f32 accumulation + VPU bias add, lane-dense store.
    acc = jnp.dot(x_ref[...], w_ref[...], preferred_element_type=jnp.float32)
    out_ref[...] = (acc + b_ref[...]).astype(out_ref.dtype)


def _choose_packing(d_model, seg_len, itemsize):
    """Packing factor P so the packed output width P*seg_len is a multiple of
    128 lanes (unmasked vector stores), with the block-diagonal weight capped
    at ~4 MiB of VMEM."""
    if seg_len % 128 == 0:
        return 1                      # already lane-dense without packing
    if 128 % seg_len == 0:
        P = 128 // seg_len
        if (P * d_model) * (P * seg_len) * itemsize <= 4 * 1024 * 1024:
            return P
    return 1                          # fallback: full-extent last dim (masked stores)


def linear_rgs_head(emb, weights, biases, *, tm_target=2048):
    """Apply the LinearRGSHead forward pass.

    Args:
      emb: (B, C, S, d_model) input embedding.
      weights: list of (in_features, out_features) weight matrices
               (transposed vs. PyTorch's nn.Linear storage).
      biases:  list of (out_features,) bias vectors.
      tm_target: target number of packed rows per grid step.

    Returns:
      (B, C, S, seg_len) regression time series.
    """
    B, C, S, D = emb.shape
    assert weights[0].shape[0] == D
    seg_len = weights[-1].shape[1]
    n_tok = B * C * S
    itemsize = jnp.dtype(emb.dtype).itemsize

    # ---- collapse the affine chain in f32 (wrapper-side, tiny) ------------
    w_comb = weights[0].astype(jnp.float32)
    b_comb = biases[0].astype(jnp.float32)
    for w, b in zip(weights[1:], biases[1:]):
        w32 = w.astype(jnp.float32)
        w_comb = w_comb @ w32
        b_comb = b_comb @ w32 + b.astype(jnp.float32)
    # TODO(synk): nn.Dropout(p=params.dropout) between the linears is identity
    # at inference; training-mode dropout is not implemented here.

    # ---- token packing factor for a lane-dense (multiple-of-128) output ---
    P = _choose_packing(D, seg_len, itemsize)

    # Block-diagonal weight (P*D, P*seg_len) and tiled bias (1, P*seg_len).
    w_bd = jnp.zeros((P * D, P * seg_len), jnp.float32)
    for p in range(P):
        w_bd = w_bd.at[p * D:(p + 1) * D,
                       p * seg_len:(p + 1) * seg_len].set(w_comb)
    b_bd = jnp.tile(b_comb, P).reshape(1, P * seg_len)      # bias stays f32
    w_bd = w_bd.astype(emb.dtype)  # resident weight; match the stream dtype

    # ---- row tiling from a VMEM byte budget --------------------------------
    in_row_bytes = P * D * itemsize
    out_row_bytes = P * seg_len * itemsize
    w_bytes = (P * D) * (P * seg_len) * itemsize
    b_bytes = P * seg_len * 4
    budget = 24 * 1024 * 1024                     # of the 32 MiB scoped limit
    avail = max(budget - 2 * (w_bytes + b_bytes), 8 * (in_row_bytes + out_row_bytes) * 2)
    tm_cap = max(8, (avail // (2 * (in_row_bytes + out_row_bytes))) // 8 * 8)
    tm_target = min(tm_target, tm_cap)

    m_rows = -(-n_tok // P)                       # packed rows needed
    grid_m = max(1, -(-m_rows // tm_target))
    if m_rows >= 16 and grid_m < 2:
        grid_m = 2        # keep >=2 grid steps so megacore / dual-TC can split
    tm = -(-m_rows // grid_m)
    tm = -(-tm // 8) * 8                          # sublane multiple
    m_rows_pad = grid_m * tm
    n_tok_pad = m_rows_pad * P

    x2d = emb.reshape(n_tok, D)
    if n_tok_pad > n_tok:
        x2d = jnp.pad(x2d, ((0, n_tok_pad - n_tok), (0, 0)))
    xp = x2d.reshape(m_rows_pad, P * D)           # free row-major repack

    out_packed = pl.pallas_call(
        _head_kernel,
        out_shape=jax.ShapeDtypeStruct((m_rows_pad, P * seg_len), emb.dtype),
        grid_spec=pltpu.PrefetchScalarGridSpec(
            num_scalar_prefetch=0,
            grid=(grid_m,),
            in_specs=[
                pl.BlockSpec((tm, P * D), lambda i: (i, 0)),
                pl.BlockSpec((P * D, P * seg_len), lambda i: (0, 0)),
                pl.BlockSpec((1, P * seg_len), lambda i: (0, 0)),
            ],
            out_specs=pl.BlockSpec((tm, P * seg_len), lambda i: (i, 0)),
        ),
        compiler_params=pltpu.CompilerParams(
            dimension_semantics=("parallel",),
            # above v5e's 16 MiB default scoped limit, within v7x's 64 MiB VMEM
            vmem_limit_bytes=32 * 1024 * 1024,
        ),
    )(xp, w_bd, b_bd)

    out_tok = out_packed.reshape(m_rows_pad * P, seg_len)[:n_tok]
    return out_tok.reshape(B, C, S, seg_len)


def init_params(key, d_model, d_hidden, seg_len, dtype=jnp.float32):
    """Deterministic init mirroring the PyTorch module:
    trunc_normal_(std=0.02) for weights, zeros for biases."""
    dims = [d_model] + list(d_hidden) + [seg_len]
    weights, biases = [], []
    for i in range(len(dims) - 1):
        key, sub = jax.random.split(key)
        w = 0.02 * jax.random.truncated_normal(
            sub, -2.0, 2.0, (dims[i], dims[i + 1]), dtype=jnp.float32
        )
        weights.append(w.astype(dtype))
        biases.append(jnp.zeros((dims[i + 1],), dtype=dtype))
    return weights, biases


def reference_forward(emb, weights, biases):
    h = emb.astype(jnp.float32)
    for w, b in zip(weights, biases):
        h = h @ w.astype(jnp.float32) + b.astype(jnp.float32)
    return h.astype(emb.dtype)


if __name__ == "__main__":
    # small shapes consistent with the module's forward:
    # emb: (batch_size=2, n_channels=4, n_segs=8, d_model=32)
    batch_size, n_channels, n_segs = 2, 4, 8
    d_model, d_hidden, seg_len = 32, (64,), 16

    key = jax.random.PRNGKey(0)
    key, k_emb = jax.random.split(key)
    emb = jax.random.normal(
        k_emb, (batch_size, n_channels, n_segs, d_model), dtype=jnp.float32
    )

    weights, biases = init_params(key, d_model, d_hidden, seg_len)

    head = jax.jit(linear_rgs_head)
    out = head(emb, weights, biases)
    out = jax.block_until_ready(out)

    assert out.shape == (batch_size, n_channels, n_segs, seg_len), out.shape

    # correctness check vs. plain-JAX layer-by-layer reference
    ref = reference_forward(emb, weights, biases)
    if not jnp.allclose(out, ref, atol=1e-5, rtol=1e-4):
        max_err = jnp.max(jnp.abs(out - ref))
        raise AssertionError(
            f"Pallas kernel mismatch vs reference (max abs err {max_err})"
        )

    print("KERNEL_OK")
</pallas_src>

<mosaic_0001>
module attributes {stable_mosaic.version = 11 : i64} {
  func.func @_head_kernel(%arg0: i32, %arg1: memref<8x256xf32, #tpu.memory_space<vmem>>, %arg2: memref<256x128xf32, #tpu.memory_space<vmem>>, %arg3: memref<1x128xf32, #tpu.memory_space<vmem>>, %arg4: memref<8x128xf32, #tpu.memory_space<vmem>>) attributes {dimension_semantics = [#tpu.dimension_semantics<parallel>], iteration_bounds = array<i64: 1>, scalar_prefetch = 0 : i64, scratch_operands = 0 : i64, tpu.core_type = #tpu.core_type<tc>, window_params = [{transform_indices = @transform_0, window_bounds = array<i64: 8, 256>}, {pipeline_mode = #tpu.pipeline_mode<synchronous>, transform_indices = @transform_1, window_bounds = array<i64: 256, 128>}, {pipeline_mode = #tpu.pipeline_mode<synchronous>, transform_indices = @transform_2, window_bounds = array<i64: 1, 128>}, {transform_indices = @transform_3, window_bounds = array<i64: 8, 128>}]} {
    %c0 = arith.constant 0 : index
    %c0_0 = arith.constant 0 : index
    %0 = vector.load %arg1[%c0, %c0_0] : memref<8x256xf32, #tpu.memory_space<vmem>>, vector<8x256xf32>
    %c0_1 = arith.constant 0 : index
    %c0_2 = arith.constant 0 : index
    %1 = vector.load %arg2[%c0_1, %c0_2] : memref<256x128xf32, #tpu.memory_space<vmem>>, vector<256x128xf32>
    %cst = arith.constant dense<0.000000e+00> : vector<8x128xf32>
    %2 = tpu.matmul %0, %1, %cst {dimension_numbers = #tpu.dot_dimension_numbers<[1], [0], [0], [1], [0, 0, 1, 1], [], []>} : vector<8x256xf32>, vector<256x128xf32>, vector<8x128xf32> -> vector<8x128xf32>
    %c0_3 = arith.constant 0 : index
    %c0_4 = arith.constant 0 : index
    %3 = vector.load %arg3[%c0_3, %c0_4] : memref<1x128xf32, #tpu.memory_space<vmem>>, vector<1x128xf32>
    %4 = vector.broadcast %3 : vector<1x128xf32> to vector<8x128xf32>
    %5 = arith.addf %2, %4 : vector<8x128xf32>
    %c0_5 = arith.constant 0 : index
    %c0_6 = arith.constant 0 : index
    %6 = vector.load %arg4[%c0_5, %c0_6] : memref<8x128xf32, #tpu.memory_space<vmem>>, vector<8x128xf32>
    tpu.vector_store %arg4[%c0_5, %c0_6], %5 {strides = array<i32>} : memref<8x128xf32, #tpu.memory_space<vmem>>, vector<8x128xf32>,
    return
  }
  func.func @transform_0(%arg0: i32) -> (i32, i32) {
    %c0_i32 = arith.constant 0 : i32
    %c0_i32_0 = arith.constant 0 : i32
    return %arg0, %c0_i32 : i32, i32
  }
  func.func @transform_1(%arg0: i32) -> (i32, i32) {
    %c0_i32 = arith.constant 0 : i32
    %c0_i32_0 = arith.constant 0 : i32
    %c0_i32_1 = arith.constant 0 : i32
    return %c0_i32, %c0_i32_0 : i32, i32
  }
  func.func @transform_2(%arg0: i32) -> (i32, i32) {
    %c0_i32 = arith.constant 0 : i32
    %c0_i32_0 = arith.constant 0 : i32
    %c0_i32_1 = arith.constant 0 : i32
    return %c0_i32, %c0_i32_0 : i32, i32
  }
  func.func @transform_3(%arg0: i32) -> (i32, i32) {
    %c0_i32 = arith.constant 0 : i32
    %c0_i32_0 = arith.constant 0 : i32
    return %arg0, %c0_i32 : i32, i32
  }
}

</mosaic_0001>

<llo_original>
// kernel: tile.8
$region0: #{tile.8}
  #allocation0 [shape = 's32[1]{0}', space=sflag, size = 0x4, scoped, tag = 'scoped memory for tile.8']
  %s0 = inlined_call_operand.vmem [shape: f32[16], index: 0, kind: input, shape index: {}]
  %s1 = inlined_call_operand.vmem [shape: f32[8,16], index: 1, kind: output, shape index: {}]
  // Predicated region
  $region2: #{tile.8} parent=0 // pred_check
    _
  $region3: #{tile.8} parent=0 // pred_check_branch
    %3 = sbr.rel (0) target = $region5
  $region4: #{tile.8} parent=0 // pred_region
    _
  $region5: #{tile.8} parent=0 // pred_fallthru
    _
  %v4 = vld [vmem:[%s0] ss:$0 sm:$0xff]
  %5 = vst [vmem:[%s1] sm:$0xff] %v4

// kernel: tile.9
$region0: #{tile.9}
  %s0 = inlined_call_operand.vmem [shape: f32[8,16], index: 0, kind: input, shape index: {}]
  %s1 = inlined_call_operand.vmem [shape: f32[1,128], index: 1, kind: output, shape index: {}]
  $region1: #{tile.9} parent=0
    #allocation0 [shape = 'u8[4096]{0}', space=vmem, size = 0x1000, scoped, tag = 'scoped mem for output reshape']
    %v2 = vld [vmem:[%s0] sm:$0x1]
    %vm3 = vcmask 130048
    %4 = vst.msk [vmem:[#allocation0] sm:$0x1] %vm3, %v2
    %s5 = scalar_lea.vmem %s0, 7
    %v6 = vld [vmem:[%s5] sm:$0x1]
    %7 = vrot.lane.b32.xlu0 %v6, 112
    %v8 = vpop.permute.xlu0 %7
    %vm9 = vcmask 1048448
    %10 = vst.msk [vmem:[#allocation0] sm:$0x1] %vm9, %v8
    %s11 = scalar_lea.vmem %s0, 6
    %v12 = vld [vmem:[%s11] sm:$0x1]
    %13 = vrot.lane.b32.xlu0 %v12, 96
    %v14 = vpop.permute.xlu0 %13
    %vm15 = vcmask 917248
    %16 = vst.msk [vmem:[#allocation0] sm:$0x1] %vm15, %v14
    %s17 = scalar_lea.vmem %s0, 5
    %v18 = vld [vmem:[%s17] sm:$0x1]
    %19 = vrot.lane.b32.xlu0 %v18, 80
    %v20 = vpop.permute.xlu0 %19
    %vm21 = vcmask 786048
    %22 = vst.msk [vmem:[#allocation0] sm:$0x1] %vm21, %v20
    %s23 = scalar_lea.vmem %s0, 4
    %v24 = vld [vmem:[%s23] sm:$0x1]
    %25 = vrot.lane.b32.xlu0 %v24, 64
    %v26 = vpop.permute.xlu0 %25
    %vm27 = vcmask 654848
    %28 = vst.msk [vmem:[#allocation0] sm:$0x1] %vm27, %v26
    %s29 = scalar_lea.vmem %s0, 3
    %v30 = vld [vmem:[%s29] sm:$0x1]
    %31 = vrot.lane.b32.xlu0 %v30, 48
    %v32 = vpop.permute.xlu0 %31
    %vm33 = vcmask 523648
    %34 = vst.msk [vmem:[#allocation0] sm:$0x1] %vm33, %v32
    %s35 = scalar_lea.vmem %s0, 2
    %v36 = vld [vmem:[%s35] sm:$0x1]
    %37 = vrot.lane.b32.xlu0 %v36, 32
    %v38 = vpop.permute.xlu0 %37
    %vm39 = vcmask 392448
    %40 = vst.msk [vmem:[#allocation0] sm:$0x1] %vm39, %v38
    %s41 = scalar_lea.vmem %s0, 1
    %v42 = vld [vmem:[%s41] sm:$0x1]
    %43 = vrot.lane.b32.xlu0 %v42, 16
    %v44 = vpop.permute.xlu0 %43
    %vm45 = vcmask 261248
    %46 = vst.msk [vmem:[#allocation0] sm:$0x1] %vm45, %v44
    %s48 = sshll.u32 1, 1
    %s49 = ssub.s32 %s48, 1
    %v51 = vld [vmem:[#allocation0] sm:%s49]
    %s52 = sshll.u32 1, 1
    %s53 = ssub.s32 %s52, 1
    %54 = vst [vmem:[%s1] sm:%s53] %v51

// kernel: linear_rgs_head.1
$region0: #{linear_rgs_head.1}
  #allocation0 [shape = 'u32[]', space=smem, size = 0x4, offset = 0x4, fixed_abs, tag = 'smem constant byte address 0x4 - core index']
  #allocation1 [shape = 'u32[144,128]{1,0:T(1,128)}', space=vmem, size = 0x12000, scoped, tag = 'internal scratch']
  %s0 = inlined_call_operand.vmem [shape: f32[8,256], index: 0, kind: input, shape index: {}]
  %s1 = inlined_call_operand.vmem [shape: f32[256,128], index: 1, kind: input, shape index: {}]
  %s2 = inlined_call_operand.vmem [shape: f32[1,128], index: 2, kind: input, shape index: {}]
  %s3 = inlined_call_operand.vmem [shape: f32[8,128], index: 3, kind: output, shape index: {}]
  %s4 = sld [smem:[#allocation0]]
  $region22: #{linear_rgs_head.1} parent=0
    _
  %s6 = ssub.s32 1, %s4
  %s7 = scalar_select 0, %s6, %s4
  // Predicated region
  $region2: #{linear_rgs_head.1} parent=0 // pred_check
    _
  $region3: #{linear_rgs_head.1} parent=0 // pred_check_branch
    %9 = sbr.rel (0) target = $region5
  $region4: #{linear_rgs_head.1} parent=0 // pred_region
    _
  $region5: #{linear_rgs_head.1} parent=0 // pred_fallthru
    _
  // Predicated region
  $region6: #{linear_rgs_head.1} parent=0 // pred_check
    _
  $region7: #{linear_rgs_head.1} parent=0 // pred_check_branch
    %11 = sbr.rel (0) target = $region9
  $region8: #{linear_rgs_head.1} parent=0 // pred_region
    _
  $region9: #{linear_rgs_head.1} parent=0 // pred_fallthru
    _
  // Predicated region
  $region10: #{linear_rgs_head.1} parent=0 // pred_check
    _
  $region11: #{linear_rgs_head.1} parent=0 // pred_check_branch
    %13 = sbr.rel (0) target = $region13
  $region12: #{linear_rgs_head.1} parent=0 // pred_region
    _
  $region13: #{linear_rgs_head.1} parent=0 // pred_fallthru
    _
  %v14 = vld [vmem:[%s0] sm:$0xff]
  %v15 = vld [vmem:[%s0 + $0x8] sm:$0xff]
  %v16 = vld [vmem:[%s1] sm:$0xff]
  %v17 = vld [vmem:[%s1 + $0x8] sm:$0xff]
  %v18 = vld [vmem:[%s1 + $0x10] sm:$0xff]
  %v19 = vld [vmem:[%s1 + $0x18] sm:$0xff]
  %v20 = vld [vmem:[%s1 + $0x20] sm:$0xff]
  %v21 = vld [vmem:[%s1 + $0x28] sm:$0xff]
  %v22 = vld [vmem:[%s1 + $0x30] sm:$0xff]
  %v23 = vld [vmem:[%s1 + $0x38] sm:$0xff]
  %v24 = vld [vmem:[%s1 + $0x40] sm:$0xff]
  %v25 = vld [vmem:[%s1 + $0x48] sm:$0xff]
  %v26 = vld [vmem:[%s1 + $0x50] sm:$0xff]
  %v27 = vld [vmem:[%s1 + $0x58] sm:$0xff]
  %v28 = vld [vmem:[%s1 + $0x60] sm:$0xff]
  %v29 = vld [vmem:[%s1 + $0x68] sm:$0xff]
  %v30 = vld [vmem:[%s1 + $0x70] sm:$0xff]
  %v31 = vld [vmem:[%s1 + $0x78] sm:$0xff]
  %v32 = vld [vmem:[%s1 + $0x80] sm:$0xff]
  %v33 = vld [vmem:[%s1 + $0x88] sm:$0xff]
  %v34 = vld [vmem:[%s1 + $0x90] sm:$0xff]
  %v35 = vld [vmem:[%s1 + $0x98] sm:$0xff]
  %v36 = vld [vmem:[%s1 + $0xa0] sm:$0xff]
  %v37 = vld [vmem:[%s1 + $0xa8] sm:$0xff]
  %v38 = vld [vmem:[%s1 + $0xb0] sm:$0xff]
  %v39 = vld [vmem:[%s1 + $0xb8] sm:$0xff]
  %v40 = vld [vmem:[%s1 + $0xc0] sm:$0xff]
  %v41 = vld [vmem:[%s1 + $0xc8] sm:$0xff]
  %v42 = vld [vmem:[%s1 + $0xd0] sm:$0xff]
  %v43 = vld [vmem:[%s1 + $0xd8] sm:$0xff]
  %v44 = vld [vmem:[%s1 + $0xe0] sm:$0xff]
  %v45 = vld [vmem:[%s1 + $0xe8] sm:$0xff]
  %v46 = vld [vmem:[%s1 + $0xf0] sm:$0xff]
  %v47 = vld [vmem:[%s1 + $0xf8] sm:$0xff]
  %v48 = vld [vmem:[%s2] sm:$0x1]
  %v50 = vlaneseq
  %v51 = vshrl.u32 %v50, 7
  %v52 = vsub.s32 0, %v51
  %v53 = vrot.slane %v48, %v52
  %55 = vmatprep.subr.mxu0 0.0
  %56 = vmatpush1.msra.mxu0 %v31
  %57 = vmatprep.subr.mxu0 0.0
  %58 = vmatpush1.msra.mxu0 %v30
  %59 = vmatprep.subr.mxu0 0.0
  %60 = vmatpush1.msra.mxu0 %v29
  %61 = vmatprep.subr.mxu0 0.0
  %62 = vmatpush1.msra.mxu0 %v28
  %63 = vmatprep.subr.mxu0 0.0
  %64 = vmatpush1.msra.mxu0 %v27
  %65 = vmatprep.subr.mxu0 0.0
  %66 = vmatpush1.msra.mxu0 %v26
  %67 = vmatprep.subr.mxu0 0.0
  %68 = vmatpush1.msra.mxu0 %v25
  %69 = vmatprep.subr.mxu0 0.0
  %70 = vmatpush1.msra.mxu0 %v24
  %71 = vmatprep.subr.mxu0 0.0
  %72 = vmatpush1.msra.mxu0 %v23
  %73 = vmatprep.subr.mxu0 0.0
  %74 = vmatpush1.msra.mxu0 %v22
  %75 = vmatprep.subr.mxu0 0.0
  %76 = vmatpush1.msra.mxu0 %v21
  %77 = vmatprep.subr.mxu0 0.0
  %78 = vmatpush1.msra.mxu0 %v20
  %79 = vmatprep.subr.mxu0 0.0
  %80 = vmatpush1.msra.mxu0 %v19
  %81 = vmatprep.subr.mxu0 0.0
  %82 = vmatpush1.msra.mxu0 %v18
  %83 = vmatprep.subr.mxu0 0.0
  %84 = vmatpush1.msra.mxu0 %v17
  %85 = vmatprep.subr.mxu0 0.0
  %86 = vmatpush1.msra.mxu0 %v16
  %87 = vmatprep.subr.mxu0 0.0
  %88 = vmatpush2.msra.mxu0 %v47
  %89 = vmatprep.subr.mxu0 0.0
  %90 = vmatpush2.msra.mxu0 %v46
  %91 = vmatprep.subr.mxu0 0.0
  %92 = vmatpush2.msra.mxu0 %v45
  %93 = vmatprep.subr.mxu0 0.0
  %94 = vmatpush2.msra.mxu0 %v44
  %95 = vmatprep.subr.mxu0 0.0
  %96 = vmatpush2.msra.mxu0 %v43
  %97 = vmatprep.subr.mxu0 0.0
  %98 = vmatpush2.msra.mxu0 %v42
  %99 = vmatprep.subr.mxu0 0.0
  %100 = vmatpush2.msra.mxu0 %v41
  %101 = vmatprep.subr.mxu0 0.0
  %102 = vmatpush2.msra.mxu0 %v40
  %103 = vmatprep.subr.mxu0 0.0
  %104 = vmatpush2.msra.mxu0 %v39
  %105 = vmatprep.subr.mxu0 0.0
  %106 = vmatpush2.msra.mxu0 %v38
  %107 = vmatprep.subr.mxu0 0.0
  %108 = vmatpush2.msra.mxu0 %v37
  %109 = vmatprep.subr.mxu0 0.0
  %110 = vmatpush2.msra.mxu0 %v36
  %111 = vmatprep.subr.mxu0 0.0
  %112 = vmatpush2.msra.mxu0 %v35
  %113 = vmatprep.subr.mxu0 0.0
  %114 = vmatpush2.msra.mxu0 %v34
  %115 = vmatprep.subr.mxu0 0.0
  %116 = vmatpush2.msra.mxu0 %v33
  %117 = vmatprep.subr.mxu0 0.0
  %118 = vmatpush2.msra.mxu0 %v32
  %119 = vmatprep.mubr.f32.mxu0 %v15
  %120 = vmatmul.mubr.f32.gmra.mxu0 %v14
  %v121 = vpop.f32.mrf.mxu0
  %v122 = vadd.f32 %v53, %v121
  %v123 = vpop.f32.mrf.mxu0
  %124 = vdwg.mxu0
  %125 = vst [vmem:[%s3] sm:$0xff] %v122
  // Predicated region
  $region14: #{linear_rgs_head.1} parent=0 // pred_check
    _
  $region15: #{linear_rgs_head.1} parent=0 // pred_check_branch
    %127 = sbr.rel (0) target = $region17
  $region16: #{linear_rgs_head.1} parent=0 // pred_region
    _
  $region17: #{linear_rgs_head.1} parent=0 // pred_fallthru
    _
  // Predicated region
  $region18: #{linear_rgs_head.1} parent=0 // pred_check
    _
  $region19: #{linear_rgs_head.1} parent=0 // pred_check_branch
    %129 = sbr.rel (0) target = $region21
  $region20: #{linear_rgs_head.1} parent=0 // pred_region
    _
  $region21: #{linear_rgs_head.1} parent=0 // pred_fallthru
    _

</llo_original>
